<compile_context>
chip_gen: v7x
topology: tpu7x:2x2x1
jax: 0.10.0
libtpu: 0.0.40
codegen_flags: <defaults>
</compile_context>

<pallas_src>
import jax
import jax.numpy as jnp
from jax.experimental import pallas as pl
from jax.experimental.pallas import tpu as pltpu


def _round_up(x, m):
    return ((x + m - 1) // m) * m


def _pad_value(dtype):
    """Neutral element for max() in the given dtype (as a Python scalar)."""
    dtype = jnp.dtype(dtype)
    if jnp.issubdtype(dtype, jnp.floating):
        return float("-inf")
    if jnp.issubdtype(dtype, jnp.integer):
        return int(jnp.iinfo(dtype).min)
    raise TypeError(f"Unsupported dtype for GlobalMaxPooler: {dtype}")


def _global_max_kernel(x_ref, o_ref):
    # x_ref: (TB, TT, TF) tile in VMEM, o_ref: (TB, TF) output-resident block.
    t = pl.program_id(2)
    # Short in-tile reduce over the trajectory axis (TT <= 128 keeps the XLU
    # work small); the bulk of the reduction is elementwise max across T steps.
    tile_max = jnp.max(x_ref[...], axis=1)

    @pl.when(t == 0)
    def _init():
        o_ref[...] = tile_max

    @pl.when(t != 0)
    def _accumulate():
        o_ref[...] = jnp.maximum(o_ref[...], tile_max)


def global_max_pool(x):
    """Pallas implementation of GlobalMaxPooler.forward.

    Args:
      x: array of shape (B, T, *rest) (any trailing dims, e.g. (B, T, H, W)).
    Returns:
      array of shape (B, prod(rest)) with the same dtype as x.
    """
    B, T = x.shape[:2]
    F = 1
    for d in x.shape[2:]:
        F *= d
    x3 = x.reshape(B, T, F)  # same as torch .view(B, T, -1)
    dtype = x3.dtype

    # --- Tile-size selection -------------------------------------------------
    # Feature (lane) axis: multiple of 128, capped at 512 for ~1-2 MiB tiles.
    if F <= 512:
        TF = _round_up(F, 128)
    else:
        TF = 512
    F_p = _round_up(F, TF)

    # Trajectory (reduction) axis: multiple of 8, capped at 128.
    if T <= 128:
        TT = _round_up(T, 8)
    else:
        TT = 128
    T_p = _round_up(T, TT)

    # Batch axis: 8 rows per output block when possible (sublane-dense stores).
    if B >= 8:
        TB = 8
        B_p = _round_up(B, 8)
    else:
        TB = B
        B_p = B

    # --- Pad so every axis is an exact multiple of its tile ------------------
    # T padding uses the dtype minimum so it is neutral for the max reduction;
    # padded B rows / F columns are discarded after the call.
    if (B_p, T_p, F_p) != (B, T, F):
        x3 = jnp.pad(
            x3,
            ((0, B_p - B), (0, T_p - T), (0, F_p - F)),
            mode="constant",
            constant_values=_pad_value(dtype),
        )

    grid = (B_p // TB, F_p // TF, T_p // TT)

    out = pl.pallas_call(
        _global_max_kernel,
        out_shape=jax.ShapeDtypeStruct((B_p, F_p), dtype),
        grid_spec=pltpu.PrefetchScalarGridSpec(
            num_scalar_prefetch=0,
            grid=grid,
            in_specs=[
                pl.BlockSpec((TB, TT, TF), lambda b, f, t: (b, t, f)),
            ],
            # Output block is revisited for every t (accumulator pattern).
            out_specs=pl.BlockSpec((TB, TF), lambda b, f, t: (b, f)),
        ),
        compiler_params=pltpu.CompilerParams(
            dimension_semantics=("parallel", "parallel", "arbitrary"),
            vmem_limit_bytes=32 * 1024 * 1024,
        ),
    )(x3)

    if (B_p, F_p) != (B, F):
        out = out[:B, :F]
    return out


if __name__ == "__main__":
    key = jax.random.PRNGKey(0)
    # Small shapes consistent with a trajectory pooler: batch=2, traj=4,
    # spatial 16x16 -> flattened feature size 256.
    x = jax.random.normal(key, (2, 4, 16, 16), dtype=jnp.float32)

    out = global_max_pool(x)
    out = jax.block_until_ready(out)

    # Reference check (pure JAX, mirrors the torch forward exactly).
    ref = jnp.max(x.reshape(x.shape[0], x.shape[1], -1), axis=1)
    assert out.shape == ref.shape, (out.shape, ref.shape)
    assert out.dtype == ref.dtype, (out.dtype, ref.dtype)
    assert bool(jnp.allclose(out, ref)), "mismatch vs reference"

    print("KERNEL_OK")
</pallas_src>

<mosaic_0001>
module attributes {stable_mosaic.version = 11 : i64} {
  func.func @_global_max_kernel(%arg0: i32, %arg1: i32, %arg2: i32, %arg3: memref<2x8x256xf32, #tpu.memory_space<vmem>>, %arg4: memref<2x256xf32, #tpu.memory_space<vmem>>) attributes {dimension_semantics = [#tpu.dimension_semantics<parallel>, #tpu.dimension_semantics<parallel>, #tpu.dimension_semantics<arbitrary>], iteration_bounds = array<i64: 1, 1, 1>, scalar_prefetch = 0 : i64, scratch_operands = 0 : i64, tpu.core_type = #tpu.core_type<tc>, window_params = [{transform_indices = @transform_0, window_bounds = array<i64: 2, 8, 256>}, {transform_indices = @transform_1, window_bounds = array<i64: 2, 256>}]} {
    %c0 = arith.constant 0 : index
    %c0_0 = arith.constant 0 : index
    %c0_1 = arith.constant 0 : index
    %0 = vector.load %arg3[%c0, %c0_0, %c0_1] : memref<2x8x256xf32, #tpu.memory_space<vmem>>, vector<2x8x256xf32>
    %cst = arith.constant dense<0xFF800000> : vector<2x256xf32>
    %1 = vector.multi_reduction <maximumf>, %0, %cst [1] : vector<2x8x256xf32> to vector<2x256xf32>
    %c0_i32 = arith.constant 0 : i32
    %2 = arith.cmpi eq, %arg2, %c0_i32 : i32
    %3 = arith.extui %2 : i1 to i32
    %c0_i32_2 = arith.constant 0 : i32
    %4 = arith.cmpi ne, %3, %c0_i32_2 : i32
    scf.if %4 {
      %c0_5 = arith.constant 0 : index
      %c0_6 = arith.constant 0 : index
      %8 = vector.load %arg4[%c0_5, %c0_6] : memref<2x256xf32, #tpu.memory_space<vmem>>, vector<2x256xf32>
      tpu.vector_store %arg4[%c0_5, %c0_6], %1 {strides = array<i32>} : memref<2x256xf32, #tpu.memory_space<vmem>>, vector<2x256xf32>,
    } else {
    }
    %c0_i32_3 = arith.constant 0 : i32
    %5 = arith.cmpi ne, %arg2, %c0_i32_3 : i32
    %6 = arith.extui %5 : i1 to i32
    %c0_i32_4 = arith.constant 0 : i32
    %7 = arith.cmpi ne, %6, %c0_i32_4 : i32
    scf.if %7 {
      %c0_5 = arith.constant 0 : index
      %c0_6 = arith.constant 0 : index
      %8 = vector.load %arg4[%c0_5, %c0_6] : memref<2x256xf32, #tpu.memory_space<vmem>>, vector<2x256xf32>
      %9 = arith.maximumf %8, %1 : vector<2x256xf32>
      %c0_7 = arith.constant 0 : index
      %c0_8 = arith.constant 0 : index
      %10 = vector.load %arg4[%c0_7, %c0_8] : memref<2x256xf32, #tpu.memory_space<vmem>>, vector<2x256xf32>
      tpu.vector_store %arg4[%c0_7, %c0_8], %9 {strides = array<i32>} : memref<2x256xf32, #tpu.memory_space<vmem>>, vector<2x256xf32>,
    } else {
    }
    return
  }
  func.func @transform_0(%arg0: i32, %arg1: i32, %arg2: i32) -> (i32, i32, i32) {
    %c0_i32 = arith.constant 0 : i32
    return %arg0, %arg2, %arg1 : i32, i32, i32
  }
  func.func @transform_1(%arg0: i32, %arg1: i32, %arg2: i32) -> (i32, i32) {
    %c0_i32 = arith.constant 0 : i32
    return %arg0, %arg1 : i32, i32
  }
}

</mosaic_0001>

<llo_original>
// kernel: tpu_custom_call.1
$region0: #{tpu_custom_call.1}
  #allocation0 [shape = 'u32[]', space=smem, size = 0x4, offset = 0x4, fixed_abs, tag = 'smem constant byte address 0x4 - core index']
  #allocation1 [shape = 'u32[144,128]{1,0:T(1,128)}', space=vmem, size = 0x12000, scoped, tag = 'internal scratch']
  %s0 = inlined_call_operand.hbm [shape: f32[2,8,256], index: 0, kind: input, shape index: {}]
  %s1 = inlined_call_operand.hbm [shape: f32[2,256], index: 1, kind: output, shape index: {}]
  %s2 = sld [smem:[#allocation0]]
  $region26: #{tpu_custom_call.1} parent=0
    _
  %s4 = ssub.s32 1, %s2
  %s5 = scalar_select 0, %s4, %s2
  $region1: #{tpu_custom_call.1} parent=0
    #allocation2 [shape = 'u8[16384]{0}', space=vmem, size = 0x4000, scoped, tag = 'input window, operand 0, single buffered']
    #allocation3 [shape = 's32[1]{0}', space=sflag, size = 0x4, scoped, tag = 'scoped memory for tpu_custom_call.1']
    #allocation4 [shape = 's32[1]{0}', space=sflag, size = 0x4, scoped, tag = 'scoped memory for tpu_custom_call.1']
    #allocation5 [shape = 'u8[2048]{0}', space=vmem, size = 0x800, scoped, tag = 'output window, operand 0, single buffered']
    %6 = vsyncpa [#allocation3], 0
    %7 = vsyncpa [#allocation4], 0
    // Predicated region
    $region2: #{tpu_custom_call.1} parent=1 // pred_check
      _
    $region3: #{tpu_custom_call.1} parent=1 // pred_check_branch
      %9 = sbr.rel (0) target = $region5
    $region4: #{tpu_custom_call.1} parent=1 // pred_region
      %s11 = ssub.s32 512, 512
      %12 = vsyncadd [#allocation3], %s11
      %s13 = sshll.u32 [#allocation2], 4
      %s14 = int_to_ptr.vmem [resolvable:$true] %s13
      %19 = dma.hbm_to_vmem [thread:$0]  %s0, 512, %s14, [#allocation3], 256, 256, 16
    $region5: #{tpu_custom_call.1} parent=1 // pred_fallthru
      _
    // Predicated region
    $region6: #{tpu_custom_call.1} parent=1 // pred_check
      _
    $region7: #{tpu_custom_call.1} parent=1 // pred_check_branch
      %21 = sbr.rel (0) target = $region9
    $region8: #{tpu_custom_call.1} parent=1 // pred_region
      %22 = dma.done [#allocation3], 512
    $region9: #{tpu_custom_call.1} parent=1 // pred_fallthru
      _
    %v23 = vld [vmem:[#allocation2] sm:$0xff]
    %v24 = vld [vmem:[#allocation2 + $0x8] sm:$0xff]
    %v25 = vld [vmem:[#allocation2 + $0x10] sm:$0xff]
    %v26 = vld [vmem:[#allocation2 + $0x18] sm:$0xff]
    %v27 = vrot.slane %v23, 4
    %v28 = vmax.f32 %v23, %v27
    %v29 = vrot.slane %v28, 2
    %v30 = vmax.f32 %v28, %v29
    %v31 = vrot.slane %v30, 1
    %v32 = vmax.f32 %v30, %v31
    %v33 = vrot.slane %v24, 4
    %v34 = vmax.f32 %v24, %v33
    %v35 = vrot.slane %v34, 2
    %v36 = vmax.f32 %v34, %v35
    %v37 = vrot.slane %v36, 1
    %v38 = vmax.f32 %v36, %v37
    %v39 = vrot.slane %v25, 4
    %v40 = vmax.f32 %v25, %v39
    %v41 = vrot.slane %v40, 2
    %v42 = vmax.f32 %v40, %v41
    %v43 = vrot.slane %v42, 1
    %v44 = vmax.f32 %v42, %v43
    %v45 = vrot.slane %v26, 4
    %v46 = vmax.f32 %v26, %v45
    %v47 = vrot.slane %v46, 2
    %v48 = vmax.f32 %v46, %v47
    %v49 = vrot.slane %v48, 1
    %v50 = vmax.f32 %v48, %v49
    %p51 = scmp.eq.s32.totalorder 0, 0
    // Predicated region
    $region10: #{tpu_custom_call.1} parent=1 // pred_check
      %p52 = pneg %p51
    $region11: #{tpu_custom_call.1} parent=1 // pred_check_branch
      %54 = sbr.rel (%p52) target = $region13
    $region12: #{tpu_custom_call.1} parent=1 // pred_region
      %v59 = vcombine.low %v32, %v38
      %v61 = vunpack.c.l.s4 1983009808
      %v62 = vunpack.c.0.s8 %v61
      %v63 = vlaneseq
      %v64 = vshrl.u32 %v63, 7
      %v65 = vsub.s32 %v62, %v64
      %v66 = vrot.slane %v59, %v65
      %v67 = vcombine.low %v44, %v50
      %v69 = vunpack.c.l.s4 1983009808
      %v70 = vunpack.c.0.s8 %v69
      %v71 = vlaneseq
      %v72 = vshrl.u32 %v71, 7
      %v73 = vsub.s32 %v70, %v72
      %v74 = vrot.slane %v67, %v73
      %vm75 = vcmask 1044484
      %v76 = vsel %vm75, %v66, %v66
      %vm77 = vcmask 1046534
      %v78 = vsel %vm77, %v66, %v76
      %v79 = vrot.slane %v74, 7
      %vm80 = vcmask 1041409
      %v81 = vsel %vm80, %v79, %v78
      %vm82 = vcmask 1043459
      %v83 = vsel %vm82, %v79, %v81
      %vm84 = vcmask 1045509
      %v85 = vsel %vm84, %v79, %v83
      %vm86 = vcmask 1047559
      %v87 = vsel %vm86, %v79, %v85
      %89 = vst [vmem:[#allocation5] sm:$0xf] %v87
    $region13: #{tpu_custom_call.1} parent=1 // pred_fallthru
      _
    %p90 = scmp.ne.s32.totalorder 0, 0
    // Predicated region
    $region14: #{tpu_custom_call.1} parent=1 // pred_check
      %p91 = pneg %p90
    $region15: #{tpu_custom_call.1} parent=1 // pred_check_branch
      %93 = sbr.rel (%p91) target = $region17
    $region16: #{tpu_custom_call.1} parent=1 // pred_region
      %v94 = vld [vmem:[#allocation5] sm:$0xf]
      %v99 = vcombine.low %v32, %v38
      %v101 = vunpack.c.l.s4 1983009808
      %v102 = vunpack.c.0.s8 %v101
      %v103 = vlaneseq
      %v104 = vshrl.u32 %v103, 7
      %v105 = vsub.s32 %v102, %v104
      %v106 = vrot.slane %v99, %v105
      %v107 = vcombine.low %v44, %v50
      %v109 = vunpack.c.l.s4 1983009808
      %v110 = vunpack.c.0.s8 %v109
      %v111 = vlaneseq
      %v112 = vshrl.u32 %v111, 7
      %v113 = vsub.s32 %v110, %v112
      %v114 = vrot.slane %v107, %v113
      %vm115 = vcmask 1044484
      %v116 = vsel %vm115, %v106, %v106
      %vm117 = vcmask 1046534
      %v118 = vsel %vm117, %v106, %v116
      %v119 = vrot.slane %v114, 7
      %vm120 = vcmask 1041409
      %v121 = vsel %vm120, %v119, %v118
      %vm122 = vcmask 1043459
      %v123 = vsel %vm122, %v119, %v121
      %vm124 = vcmask 1045509
      %v125 = vsel %vm124, %v119, %v123
      %vm126 = vcmask 1047559
      %v127 = vsel %vm126, %v119, %v125
      %v129 = vmax.f32 %v94, %v127
      %130 = vst [vmem:[#allocation5] sm:$0xf] %v129
    $region17: #{tpu_custom_call.1} parent=1 // pred_fallthru
      _
    // Predicated region
    $region18: #{tpu_custom_call.1} parent=1 // pred_check
      _
    $region19: #{tpu_custom_call.1} parent=1 // pred_check_branch
      %132 = sbr.rel (0) target = $region21
    $region20: #{tpu_custom_call.1} parent=1 // pred_region
      %s134 = ssub.s32 64, 64
      %135 = vsyncadd [#allocation4], %s134
      %s137 = sshll.u32 [#allocation5], 4
      %s138 = int_to_ptr.vmem [resolvable:$true] %s137
      %140 = dma.vmem_to_hbm [thread:$0]  %s138, 64, %s1, [#allocation4]
    $region21: #{tpu_custom_call.1} parent=1 // pred_fallthru
      _
    // Predicated region
    $region22: #{tpu_custom_call.1} parent=1 // pred_check
      _
    $region23: #{tpu_custom_call.1} parent=1 // pred_check_branch
      %142 = sbr.rel (0) target = $region25
    $region24: #{tpu_custom_call.1} parent=1 // pred_region
      %143 = dma.done [#allocation4], 64
    $region25: #{tpu_custom_call.1} parent=1 // pred_fallthru
      _
    %144 = vsyncpa [#allocation3], 1
    %145 = vsyncpa [#allocation4], 1

</llo_original>
